<compile_context>
chip_gen: v7x
topology: tpu7x:2x2x1
jax: 0.10.0
libtpu: 0.0.40
codegen_flags: <defaults>
</compile_context>

<pallas_src>
import functools

import jax
import jax.numpy as jnp
from jax.experimental import pallas as pl
from jax.experimental.pallas import tpu as pltpu

_LANE = 128      # TPU lane width (last-dim vreg extent)
_SUBLANE = 8     # TPU sublane width (second-to-last dim vreg extent)
_TM_MAX = 4096   # max batch tile (review: 2048-4096; fits all generations)


def _round_up(x, m):
    return ((x + m - 1) // m) * m


def _cdiv(a, b):
    return (a + b - 1) // b


def _choose_tm(batch):
    """Batch tile: single tile for small B, big tiles (and >=2 grid steps for
    v7x's two TensorCores) for large B."""
    if batch <= 512:
        return max(_SUBLANE, _round_up(batch, _SUBLANE))
    return min(_TM_MAX, _round_up(_cdiv(batch, 2), _SUBLANE))


def _mlp_kernel(x_ref, w1_ref, b1_ref, w2_ref, b2_ref, o_ref):
    # fc1: (TM, in) @ (in, H_pad) -> f32 accumulation on the MXU.
    # x is cast to the weight dtype (bf16 by default); a no-op if the caller
    # already streams bf16 state (halves the state-read HBM bytes).
    x = x_ref[...].astype(w1_ref.dtype)
    h = jnp.dot(x, w1_ref[...], preferred_element_type=jnp.float32)
    h = jnp.maximum(h + b1_ref[...], 0.0)            # bias + relu in f32 (VPU)
    # fc2: (TM, H_pad) @ (H_pad, A_pad) -> lane-dense f32 output slab.
    q = jnp.dot(h.astype(w2_ref.dtype), w2_ref[...],
                preferred_element_type=jnp.float32)
    o_ref[...] = (q + b2_ref[...]).astype(o_ref.dtype)


def prepare_params(w1, b1, w2, b2, *, weight_dtype=jnp.bfloat16):
    """One-time (init-time) padding/cast of the parameters.

    w1: (input_size, hidden)   b1: (1, hidden) or (hidden,)
    w2: (hidden, nb_action)    b2: (1, nb_action) or (nb_action,)

    hidden / nb_action are zero-padded to 128 lanes (numerically inert through
    relu and the second matmul); weights are cast to `weight_dtype`
    (bf16 by default -- native on the MXU of all three generations), biases
    stay f32.  Pass weight_dtype=jnp.float32 to opt out of bf16.
    """
    in_sz, hidden = w1.shape
    nb_action = w2.shape[1]
    h_pad = _round_up(hidden, _LANE)
    a_pad = _round_up(nb_action, _LANE)

    b1 = jnp.asarray(b1, jnp.float32).reshape(1, hidden)
    b2 = jnp.asarray(b2, jnp.float32).reshape(1, nb_action)

    w1_p = jnp.pad(jnp.asarray(w1), ((0, 0), (0, h_pad - hidden))).astype(weight_dtype)
    b1_p = jnp.pad(b1, ((0, 0), (0, h_pad - hidden)))
    w2_p = jnp.pad(jnp.asarray(w2), ((0, h_pad - hidden), (0, a_pad - nb_action))).astype(weight_dtype)
    b2_p = jnp.pad(b2, ((0, 0), (0, a_pad - nb_action)))
    return (w1_p, b1_p, w2_p, b2_p)


@jax.jit
def network_forward_padded(state, w1_p, b1_p, w2_p, b2_p):
    """state: (B, input_size); padded params from prepare_params.

    Returns the lane-dense (B, 128) f32 q-value slab (columns >= nb_action are
    exactly 0).  Consumers that can read the slab directly (e.g. a fused loss)
    avoid any post-kernel slice.
    """
    B, in_sz = state.shape
    h_pad = w1_p.shape[1]
    a_pad = w2_p.shape[1]

    tm = _choose_tm(B)
    grid = (_cdiv(B, tm),)  # ragged last block: reads padded, writes clipped

    return pl.pallas_call(
        _mlp_kernel,
        out_shape=jax.ShapeDtypeStruct((B, a_pad), jnp.float32),
        grid_spec=pltpu.PrefetchScalarGridSpec(
            num_scalar_prefetch=0,
            grid=grid,
            in_specs=[
                # state tile marches over the batch axis (double-buffered DMA)
                pl.BlockSpec((tm, in_sz), lambda i: (i, 0)),
                # weights / biases stay resident in VMEM across the grid
                pl.BlockSpec((in_sz, h_pad), lambda i: (0, 0)),
                pl.BlockSpec((1, h_pad), lambda i: (0, 0)),
                pl.BlockSpec((h_pad, a_pad), lambda i: (0, 0)),
                pl.BlockSpec((1, a_pad), lambda i: (0, 0)),
            ],
            out_specs=pl.BlockSpec((tm, a_pad), lambda i: (i, 0)),
        ),
        compiler_params=pltpu.CompilerParams(
            # batch tiles are independent -> shard across v7x's 2 TensorCores
            dimension_semantics=("parallel",),
            # TM<=4096 keeps the double-buffered footprint (~6 MB) well under
            # every generation's scoped-VMEM default; set vmem_limit_bytes
            # explicitly only if TM is pushed past ~8192 on v5e.
        ),
    )(state, w1_p, b1_p, w2_p, b2_p)


@functools.partial(jax.jit, static_argnames=("nb_action",))
def network_forward(state, params, nb_action):
    """API-compatible forward: returns (B, nb_action) f32 q-values."""
    if state.ndim == 1:
        state = state[None, :]
    q_pad = network_forward_padded(state, *params)
    # Lane slice only (batch dim is not padded); prefer network_forward_padded
    # when the consumer can read the lane-dense slab directly.
    return q_pad[:, :nb_action]


def init_params(key, input_size, nb_action, hidden=30):
    """Deterministic init mirroring nn.Linear's U(-1/sqrt(fan_in), 1/sqrt(fan_in))."""
    k1, k2, k3, k4 = jax.random.split(key, 4)
    bound1 = 1.0 / jnp.sqrt(jnp.float32(input_size))
    bound2 = 1.0 / jnp.sqrt(jnp.float32(hidden))
    # stored as (in_features, out_features) == transpose of PyTorch weight
    w1 = jax.random.uniform(k1, (input_size, hidden), jnp.float32, -bound1, bound1)
    b1 = jax.random.uniform(k2, (1, hidden), jnp.float32, -bound1, bound1)
    w2 = jax.random.uniform(k3, (hidden, nb_action), jnp.float32, -bound2, bound2)
    b2 = jax.random.uniform(k4, (1, nb_action), jnp.float32, -bound2, bound2)
    return w1, b1, w2, b2


def _reference(state, w1, b1, w2, b2, weight_dtype):
    """Pure-JAX reference mirroring the kernel numerics (bf16-rounded operands,
    f32 accumulation / bias / relu / output)."""
    f32 = jnp.float32
    xq = state.astype(weight_dtype).astype(f32)
    w1q = w1.astype(weight_dtype).astype(f32)
    w2q = w2.astype(weight_dtype).astype(f32)
    h = jnp.maximum(xq @ w1q + b1, 0.0)
    hq = h.astype(weight_dtype).astype(f32)
    return hq @ w2q + b2


if __name__ == "__main__":
    key = jax.random.PRNGKey(0)
    input_size = 8
    nb_action = 3
    batch = 4

    kp, kx = jax.random.split(key)
    w1, b1, w2, b2 = init_params(kp, input_size, nb_action)
    params = prepare_params(w1, b1, w2, b2)          # pad + bf16 cast ONCE
    state = jax.random.normal(kx, (batch, input_size), jnp.float32)

    q_values = network_forward(state, params, nb_action)
    q_values = jax.block_until_ready(q_values)
    assert q_values.shape == (batch, nb_action)

    ref = _reference(state, w1, b1, w2, b2, jnp.bfloat16)
    assert jnp.allclose(q_values, ref, atol=1e-3, rtol=1e-3)
    # Coarse check against the full-f32 PyTorch-style forward (bf16 drift only).
    ref32 = jnp.maximum(state @ w1 + b1, 0.0) @ w2 + b2
    assert jnp.allclose(q_values, ref32, atol=5e-2, rtol=5e-2)

    # Larger, non-multiple batch exercises the multi-step grid + ragged last
    # block (B=1000 -> TM=504, grid=2 so both v7x TensorCores get work).
    big_state = jax.random.normal(jax.random.PRNGKey(1), (1000, input_size), jnp.float32)
    q_big = jax.block_until_ready(network_forward(big_state, params, nb_action))
    ref_big = _reference(big_state, w1, b1, w2, b2, jnp.bfloat16)
    assert q_big.shape == (1000, nb_action)
    assert jnp.allclose(q_big, ref_big, atol=1e-3, rtol=1e-3)

    # Lane-dense slab path (no post-kernel slice) used by fused consumers.
    q_slab = jax.block_until_ready(network_forward_padded(big_state, *params))
    assert q_slab.shape == (1000, 128)
    assert jnp.allclose(q_slab[:, :nb_action], ref_big, atol=1e-3, rtol=1e-3)
    assert jnp.all(q_slab[:, nb_action:] == 0.0)

    # TODO(synk): if q-value precision must be bit-exact with f32 PyTorch,
    # call prepare_params(..., weight_dtype=jnp.float32) to disable bf16.
    print("KERNEL_OK")
</pallas_src>

<mosaic_0001>
module attributes {stable_mosaic.version = 11 : i64} {
  func.func @_mlp_kernel(%arg0: i32, %arg1: memref<8x8xf32, #tpu.memory_space<vmem>>, %arg2: memref<8x128xbf16, #tpu.memory_space<vmem>>, %arg3: memref<1x128xf32, #tpu.memory_space<vmem>>, %arg4: memref<128x128xbf16, #tpu.memory_space<vmem>>, %arg5: memref<1x128xf32, #tpu.memory_space<vmem>>, %arg6: memref<8x128xf32, #tpu.memory_space<vmem>>) attributes {dimension_semantics = [#tpu.dimension_semantics<parallel>], iteration_bounds = array<i64: 1>, scalar_prefetch = 0 : i64, scratch_operands = 0 : i64, tpu.core_type = #tpu.core_type<tc>, window_params = [{transform_indices = @transform_0, window_bounds = array<i64: 8, 8>}, {pipeline_mode = #tpu.pipeline_mode<synchronous>, transform_indices = @transform_1, window_bounds = array<i64: 8, 128>}, {pipeline_mode = #tpu.pipeline_mode<synchronous>, transform_indices = @transform_2, window_bounds = array<i64: 1, 128>}, {pipeline_mode = #tpu.pipeline_mode<synchronous>, transform_indices = @transform_3, window_bounds = array<i64: 128, 128>}, {pipeline_mode = #tpu.pipeline_mode<synchronous>, transform_indices = @transform_4, window_bounds = array<i64: 1, 128>}, {transform_indices = @transform_5, window_bounds = array<i64: 8, 128>}]} {
    %c0 = arith.constant 0 : index
    %c0_0 = arith.constant 0 : index
    %0 = vector.load %arg1[%c0, %c0_0] : memref<8x8xf32, #tpu.memory_space<vmem>>, vector<8x8xf32>
    %1 = arith.truncf %0 : vector<8x8xf32> to vector<8x8xbf16>
    %c0_1 = arith.constant 0 : index
    %c0_2 = arith.constant 0 : index
    %2 = vector.load %arg2[%c0_1, %c0_2] : memref<8x128xbf16, #tpu.memory_space<vmem>>, vector<8x128xbf16>
    %cst = arith.constant dense<0.000000e+00> : vector<8x128xf32>
    %3 = tpu.matmul %1, %2, %cst {dimension_numbers = #tpu.dot_dimension_numbers<[1], [0], [0], [1], [0, 0, 1, 1], [], []>} : vector<8x8xbf16>, vector<8x128xbf16>, vector<8x128xf32> -> vector<8x128xf32>
    %c0_3 = arith.constant 0 : index
    %c0_4 = arith.constant 0 : index
    %4 = vector.load %arg3[%c0_3, %c0_4] : memref<1x128xf32, #tpu.memory_space<vmem>>, vector<1x128xf32>
    %5 = vector.broadcast %4 : vector<1x128xf32> to vector<8x128xf32>
    %6 = arith.addf %3, %5 : vector<8x128xf32>
    %cst_5 = arith.constant 0.000000e+00 : f32
    %7 = vector.broadcast %cst_5 : f32 to vector<8x128xf32>
    %8 = arith.maximumf %6, %7 : vector<8x128xf32>
    %9 = arith.truncf %8 : vector<8x128xf32> to vector<8x128xbf16>
    %c0_6 = arith.constant 0 : index
    %c0_7 = arith.constant 0 : index
    %10 = vector.load %arg4[%c0_6, %c0_7] : memref<128x128xbf16, #tpu.memory_space<vmem>>, vector<128x128xbf16>
    %cst_8 = arith.constant dense<0.000000e+00> : vector<8x128xf32>
    %11 = tpu.matmul %9, %10, %cst_8 {dimension_numbers = #tpu.dot_dimension_numbers<[1], [0], [0], [1], [0, 0, 1, 1], [], []>} : vector<8x128xbf16>, vector<128x128xbf16>, vector<8x128xf32> -> vector<8x128xf32>
    %c0_9 = arith.constant 0 : index
    %c0_10 = arith.constant 0 : index
    %12 = vector.load %arg5[%c0_9, %c0_10] : memref<1x128xf32, #tpu.memory_space<vmem>>, vector<1x128xf32>
    %13 = vector.broadcast %12 : vector<1x128xf32> to vector<8x128xf32>
    %14 = arith.addf %11, %13 : vector<8x128xf32>
    %c0_11 = arith.constant 0 : index
    %c0_12 = arith.constant 0 : index
    %15 = vector.load %arg6[%c0_11, %c0_12] : memref<8x128xf32, #tpu.memory_space<vmem>>, vector<8x128xf32>
    tpu.vector_store %arg6[%c0_11, %c0_12], %14 {strides = array<i32>} : memref<8x128xf32, #tpu.memory_space<vmem>>, vector<8x128xf32>,
    return
  }
  func.func @transform_0(%arg0: i32) -> (i32, i32) {
    %c0_i32 = arith.constant 0 : i32
    %c0_i32_0 = arith.constant 0 : i32
    return %arg0, %c0_i32 : i32, i32
  }
  func.func @transform_1(%arg0: i32) -> (i32, i32) {
    %c0_i32 = arith.constant 0 : i32
    %c0_i32_0 = arith.constant 0 : i32
    %c0_i32_1 = arith.constant 0 : i32
    return %c0_i32, %c0_i32_0 : i32, i32
  }
  func.func @transform_2(%arg0: i32) -> (i32, i32) {
    %c0_i32 = arith.constant 0 : i32
    %c0_i32_0 = arith.constant 0 : i32
    %c0_i32_1 = arith.constant 0 : i32
    return %c0_i32, %c0_i32_0 : i32, i32
  }
  func.func @transform_3(%arg0: i32) -> (i32, i32) {
    %c0_i32 = arith.constant 0 : i32
    %c0_i32_0 = arith.constant 0 : i32
    %c0_i32_1 = arith.constant 0 : i32
    return %c0_i32, %c0_i32_0 : i32, i32
  }
  func.func @transform_4(%arg0: i32) -> (i32, i32) {
    %c0_i32 = arith.constant 0 : i32
    %c0_i32_0 = arith.constant 0 : i32
    %c0_i32_1 = arith.constant 0 : i32
    return %c0_i32, %c0_i32_0 : i32, i32
  }
  func.func @transform_5(%arg0: i32) -> (i32, i32) {
    %c0_i32 = arith.constant 0 : i32
    %c0_i32_0 = arith.constant 0 : i32
    return %arg0, %c0_i32 : i32, i32
  }
}

</mosaic_0001>

<llo_original>
// kernel: network_forward_padded.1
$region0: #{network_forward_padded.1}
  #allocation0 [shape = 'u32[]', space=smem, size = 0x4, offset = 0x4, fixed_abs, tag = 'smem constant byte address 0x4 - core index']
  #allocation1 [shape = 'u32[144,128]{1,0:T(1,128)}', space=vmem, size = 0x12000, scoped, tag = 'internal scratch']
  %s0 = inlined_call_operand.hbm [shape: f32[4,8], index: 0, kind: input, shape index: {}]
  %s1 = inlined_call_operand.hbm [shape: bf16[8,128], index: 1, kind: input, shape index: {}]
  %s2 = inlined_call_operand.vmem [shape: f32[1,128], index: 2, kind: input, shape index: {}]
  %s3 = inlined_call_operand.hbm [shape: bf16[128,128], index: 3, kind: input, shape index: {}]
  %s4 = inlined_call_operand.vmem [shape: f32[1,128], index: 4, kind: input, shape index: {}]
  %s5 = inlined_call_operand.hbm [shape: f32[4,128], index: 5, kind: output, shape index: {}]
  %s6 = sld [smem:[#allocation0]]
  $region42: #{network_forward_padded.1} parent=0
    _
  %s8 = ssub.s32 1, %s6
  %s9 = scalar_select 0, %s8, %s6
  $region1: #{network_forward_padded.1} parent=0
    #allocation2 [shape = 'u8[4096]{0}', space=vmem, size = 0x1000, scoped, tag = 'input window, operand 0, single buffered']
    #allocation3 [shape = 's32[1]{0}', space=sflag, size = 0x4, scoped, tag = 'scoped memory for network_forward_padded.1']
    #allocation4 [shape = 's32[1]{0}', space=sflag, size = 0x4, scoped, tag = 'scoped memory for network_forward_padded.1']
    #allocation5 [shape = 'u8[2048]{0}', space=vmem, size = 0x800, scoped, tag = 'input window, operand 1, single buffered']
    #allocation6 [shape = 's32[1]{0}', space=sflag, size = 0x4, scoped, tag = 'scoped memory for network_forward_padded.1']
    #allocation7 [shape = 'u8[32768]{0}', space=vmem, size = 0x8000, scoped, tag = 'input window, operand 3, single buffered']
    #allocation8 [shape = 'u8[4096]{0}', space=vmem, size = 0x1000, scoped, tag = 'output window, operand 0, single buffered']
    %10 = vsyncpa [#allocation3], 0
    %11 = vsyncpa [#allocation6], 0
    %12 = vsyncpa [#allocation4], 0
    // Predicated region
    $region2: #{network_forward_padded.1} parent=1 // pred_check
      _
    $region3: #{network_forward_padded.1} parent=1 // pred_check_branch
      %14 = sbr.rel (0) target = $region5
    $region4: #{network_forward_padded.1} parent=1 // pred_region
      %s16 = ssub.s32 128, 64
      %17 = vsyncadd [#allocation3], %s16
      %s18 = sshll.u32 [#allocation2], 4
      %s19 = int_to_ptr.vmem [resolvable:$true] %s18
      %24 = dma.hbm_to_vmem [thread:$0]  %s0, 64, %s19, [#allocation3], 64, 64, 4
    $region5: #{network_forward_padded.1} parent=1 // pred_fallthru
      _
    // Predicated region
    $region6: #{network_forward_padded.1} parent=1 // pred_check
      _
    $region7: #{network_forward_padded.1} parent=1 // pred_check_branch
      %26 = sbr.rel (0) target = $region9
    $region8: #{network_forward_padded.1} parent=1 // pred_region
      %s28 = ssub.s32 64, 64
      %29 = vsyncadd [#allocation6], %s28
      %s31 = sshll.u32 [#allocation5], 4
      %s32 = int_to_ptr.vmem [resolvable:$true] %s31
      %34 = dma.hbm_to_vmem [thread:$0]  %s1, 64, %s32, [#allocation6]
    $region9: #{network_forward_padded.1} parent=1 // pred_fallthru
      _
    // Predicated region
    $region10: #{network_forward_padded.1} parent=1 // pred_check
      _
    $region11: #{network_forward_padded.1} parent=1 // pred_check_branch
      %36 = sbr.rel (0) target = $region13
    $region12: #{network_forward_padded.1} parent=1 // pred_region
      _
    $region13: #{network_forward_padded.1} parent=1 // pred_fallthru
      _
    // Predicated region
    $region14: #{network_forward_padded.1} parent=1 // pred_check
      _
    $region15: #{network_forward_padded.1} parent=1 // pred_check_branch
      %38 = sbr.rel (0) target = $region17
    $region16: #{network_forward_padded.1} parent=1 // pred_region
      %s40 = ssub.s32 1024, 1024
      %41 = vsyncadd [#allocation6], %s40
      %s42 = sshll.u32 [#allocation7], 4
      %s43 = int_to_ptr.vmem [resolvable:$true] %s42
      %48 = dma.hbm_to_vmem [thread:$0]  %s3, 1024, %s43, [#allocation6], 64, 64, 4
    $region17: #{network_forward_padded.1} parent=1 // pred_fallthru
      _
    // Predicated region
    $region18: #{network_forward_padded.1} parent=1 // pred_check
      _
    $region19: #{network_forward_padded.1} parent=1 // pred_check_branch
      %50 = sbr.rel (0) target = $region21
    $region20: #{network_forward_padded.1} parent=1 // pred_region
      _
    $region21: #{network_forward_padded.1} parent=1 // pred_fallthru
      _
    // Predicated region
    $region22: #{network_forward_padded.1} parent=1 // pred_check
      _
    $region23: #{network_forward_padded.1} parent=1 // pred_check_branch
      %52 = sbr.rel (0) target = $region25
    $region24: #{network_forward_padded.1} parent=1 // pred_region
      %53 = dma.done [#allocation3], 128
    $region25: #{network_forward_padded.1} parent=1 // pred_fallthru
      _
    // Predicated region
    $region26: #{network_forward_padded.1} parent=1 // pred_check
      _
    $region27: #{network_forward_padded.1} parent=1 // pred_check_branch
      %55 = sbr.rel (0) target = $region29
    $region28: #{network_forward_padded.1} parent=1 // pred_region
      %56 = dma.done [#allocation6], 64
    $region29: #{network_forward_padded.1} parent=1 // pred_fallthru
      _
    // Predicated region
    $region30: #{network_forward_padded.1} parent=1 // pred_check
      _
    $region31: #{network_forward_padded.1} parent=1 // pred_check_branch
      %58 = sbr.rel (0) target = $region33
    $region32: #{network_forward_padded.1} parent=1 // pred_region
      %59 = dma.done [#allocation6], 1024
    $region33: #{network_forward_padded.1} parent=1 // pred_fallthru
      _
    %v61 = vld [vmem:[#allocation2] sm:$0xff]
    %v62 = vpack.c.bf16 %v61, %v61
    %v63 = vld [vmem:[#allocation5] sm:$0xf]
    %v64 = vld [vmem:[%s2] sm:$0x1]
    %v66 = vlaneseq
    %v67 = vshrl.u32 %v66, 7
    %v68 = vsub.s32 0, %v67
    %v69 = vrot.slane %v64, %v68
    %vm71 = vcmask 64512
    %v73 = vsel %vm71, %v62, 0
    %vm75 = vcmask 1043456
    %v77 = vsel %vm75, %v63, 0
    %79 = vmatprep.subr.bf16.mxu0 0
    %80 = vmatpush1.bf16.msra.mxu0 %v77
    %81 = vmatprep.subr.bf16.mxu0 0
    %82 = vmatpush1.bf16.msra.mxu0 0
    %83 = vmatprep.subr.bf16.mxu0 0
    %84 = vmatpush1.bf16.msra.mxu0 0
    %85 = vmatprep.subr.bf16.mxu0 0
    %86 = vmatpush1.bf16.msra.mxu0 0
    %87 = vmatprep.subr.bf16.mxu0 0
    %88 = vmatpush1.bf16.msra.mxu0 0
    %89 = vmatprep.subr.bf16.mxu0 0
    %90 = vmatpush1.bf16.msra.mxu0 0
    %91 = vmatprep.subr.bf16.mxu0 0
    %92 = vmatpush1.bf16.msra.mxu0 0
    %93 = vmatprep.subr.bf16.mxu0 0
    %94 = vmatpush1.bf16.msra.mxu0 0
    %95 = vmatprep.subr.bf16.mxu0 0
    %96 = vmatpush1.bf16.msra.mxu0 0
    %97 = vmatprep.subr.bf16.mxu0 0
    %98 = vmatpush1.bf16.msra.mxu0 0
    %99 = vmatprep.subr.bf16.mxu0 0
    %100 = vmatpush1.bf16.msra.mxu0 0
    %101 = vmatprep.subr.bf16.mxu0 0
    %102 = vmatpush1.bf16.msra.mxu0 0
    %103 = vmatprep.subr.bf16.mxu0 0
    %104 = vmatpush1.bf16.msra.mxu0 0
    %105 = vmatprep.subr.bf16.mxu0 0
    %106 = vmatpush1.bf16.msra.mxu0 0
    %107 = vmatprep.subr.bf16.mxu0 0
    %108 = vmatpush1.bf16.msra.mxu0 0
    %109 = vmatprep.subr.bf16.mxu0 0
    %110 = vmatpush1.bf16.msra.mxu0 0
    %111 = vmatprep.mubr.bf16.mxu0 0
    %112 = vmatmul.mubr.bf16.gmra.mrb[0].mxu0 %v73
    %v113 = vpop.f32.mrb[0].mxu0
    %v114 = vadd.f32 %v69, %v113
    %v115 = vpop.f32.mrb[0].mxu0
    %v116 = vpop.f32.mrb[0].mxu0
    %v117 = vpop.f32.mrb[0].mxu0
    %118 = vdwg.mxu0
    %v119 = vmax.f32 %v114, 0.0
    %v120 = vpack.c.bf16 %v119, %v119
    %v121 = vld [vmem:[#allocation7] sm:$0xf]
    %v122 = vld [vmem:[#allocation7 + $0x4] sm:$0xf]
    %v123 = vld [vmem:[#allocation7 + $0x8] sm:$0xf]
    %v124 = vld [vmem:[#allocation7 + $0xc] sm:$0xf]
    %v125 = vld [vmem:[#allocation7 + $0x10] sm:$0xf]
    %v126 = vld [vmem:[#allocation7 + $0x14] sm:$0xf]
    %v127 = vld [vmem:[#allocation7 + $0x18] sm:$0xf]
    %v128 = vld [vmem:[#allocation7 + $0x1c] sm:$0xf]
    %v129 = vld [vmem:[#allocation7 + $0x20] sm:$0xf]
    %v130 = vld [vmem:[#allocation7 + $0x24] sm:$0xf]
    %v131 = vld [vmem:[#allocation7 + $0x28] sm:$0xf]
    %v132 = vld [vmem:[#allocation7 + $0x2c] sm:$0xf]
    %v133 = vld [vmem:[#allocation7 + $0x30] sm:$0xf]
    %v134 = vld [vmem:[#allocation7 + $0x34] sm:$0xf]
    %v135 = vld [vmem:[#allocation7 + $0x38] sm:$0xf]
    %v136 = vld [vmem:[#allocation7 + $0x3c] sm:$0xf]
    %v137 = vld [vmem:[%s4] sm:$0x1]
    %v139 = vlaneseq
    %v140 = vshrl.u32 %v139, 7
    %v141 = vsub.s32 0, %v140
    %v142 = vrot.slane %v137, %v141
    %v160 = vunpack.c.l.b16 %v121
    %v161 = vunpack.c.l.b16 %v122
    %v162 = vunpack.c.l.b16 %v123
    %v163 = vunpack.c.l.b16 %v124
    %v164 = vunpack.c.l.b16 %v125
    %v165 = vunpack.c.l.b16 %v126
    %v166 = vunpack.c.l.b16 %v127
    %v167 = vunpack.c.l.b16 %v128
    %v168 = vunpack.c.l.b16 %v129
    %v169 = vunpack.c.l.b16 %v130
    %v170 = vunpack.c.l.b16 %v131
    %v171 = vunpack.c.l.b16 %v132
    %v172 = vunpack.c.l.b16 %v133
    %v173 = vunpack.c.l.b16 %v134
    %v174 = vunpack.c.l.b16 %v135
    %v175 = vunpack.c.l.b16 %v136
    %v176 = vpack.c.b16 %v161, %v160
    %v177 = vpack.c.b16 %v163, %v162
    %v178 = vpack.c.b16 %v165, %v164
    %v179 = vpack.c.b16 %v167, %v166
    %v180 = vpack.c.b16 %v169, %v168
    %v181 = vpack.c.b16 %v171, %v170
    %v182 = vpack.c.b16 %v173, %v172
    %v183 = vpack.c.b16 %v175, %v174
    %192 = vmatprep.subr.bf16.mxu0 0
    %193 = vmatpush1.bf16.msra.mxu0 %v176
    %194 = vmatprep.subr.bf16.mxu0 0
    %195 = vmatpush1.bf16.msra.mxu0 %v177
    %196 = vmatprep.subr.bf16.mxu0 0
    %197 = vmatpush1.bf16.msra.mxu0 %v178
    %198 = vmatprep.subr.bf16.mxu0 0
    %199 = vmatpush1.bf16.msra.mxu0 %v179
    %200 = vmatprep.subr.bf16.mxu0 0
    %201 = vmatpush1.bf16.msra.mxu0 %v180
    %202 = vmatprep.subr.bf16.mxu0 0
    %203 = vmatpush1.bf16.msra.mxu0 %v181
    %204 = vmatprep.subr.bf16.mxu0 0
    %205 = vmatpush1.bf16.msra.mxu0 %v182
    %206 = vmatprep.subr.bf16.mxu0 0
    %207 = vmatpush1.bf16.msra.mxu0 %v183
    %208 = vmatprep.subr.bf16.mxu0 0
    %209 = vmatpush1.bf16.msra.mxu0 0
    %210 = vmatprep.subr.bf16.mxu0 0
    %211 = vmatpush1.bf16.msra.mxu0 0
    %212 = vmatprep.subr.bf16.mxu0 0
    %213 = vmatpush1.bf16.msra.mxu0 0
    %214 = vmatprep.subr.bf16.mxu0 0
    %215 = vmatpush1.bf16.msra.mxu0 0
    %216 = vmatprep.subr.bf16.mxu0 0
    %217 = vmatpush1.bf16.msra.mxu0 0
    %218 = vmatprep.subr.bf16.mxu0 0
    %219 = vmatpush1.bf16.msra.mxu0 0
    %220 = vmatprep.subr.bf16.mxu0 0
    %221 = vmatpush1.bf16.msra.mxu0 0
    %222 = vmatprep.subr.bf16.mxu0 0
    %223 = vmatpush1.bf16.msra.mxu0 0
    %224 = vmatprep.mubr.bf16.mxu0 0
    %225 = vmatmul.mubr.bf16.gmra.mrb[0].mxu0 %v120
    %v226 = vpop.f32.mrb[0].mxu0
    %v227 = vadd.f32 %v142, %v226
    %v228 = vpop.f32.mrb[0].mxu0
    %v229 = vpop.f32.mrb[0].mxu0
    %v230 = vpop.f32.mrb[0].mxu0
    %231 = vdwg.mxu0
    %232 = vst [vmem:[#allocation8] sm:$0xff] %v227
    // Predicated region
    $region34: #{network_forward_padded.1} parent=1 // pred_check
      _
    $region35: #{network_forward_padded.1} parent=1 // pred_check_branch
      %234 = sbr.rel (0) target = $region37
    $region36: #{network_forward_padded.1} parent=1 // pred_region
      %s236 = ssub.s32 128, 64
      %237 = vsyncadd [#allocation4], %s236
      %s238 = sshll.u32 [#allocation8], 4
      %s239 = int_to_ptr.vmem [resolvable:$true] %s238
      %244 = dma.vmem_to_hbm [thread:$0]  %s239, 64, %s5, [#allocation4], 64, 64, 4
    $region37: #{network_forward_padded.1} parent=1 // pred_fallthru
      _
    // Predicated region
    $region38: #{network_forward_padded.1} parent=1 // pred_check
      _
    $region39: #{network_forward_padded.1} parent=1 // pred_check_branch
      %246 = sbr.rel (0) target = $region41
    $region40: #{network_forward_padded.1} parent=1 // pred_region
      %247 = dma.done [#allocation4], 128
    $region41: #{network_forward_padded.1} parent=1 // pred_fallthru
      _
    %248 = vsyncpa [#allocation3], 1
    %249 = vsyncpa [#allocation6], 1
    %250 = vsyncpa [#allocation4], 1

</llo_original>
